<compile_context>
chip_gen: v7x
topology: tpu7x:2x2x1
jax: 0.10.0
libtpu: 0.0.40
codegen_flags: <defaults>
</compile_context>

<pallas_src>
import math

import jax
import jax.numpy as jnp
from jax import lax
from jax.experimental import pallas as pl
from jax.experimental.pallas import tpu as pltpu

# ----------------------------- config ------------------------------------- #
HIDDEN = 128          # config.hidden_size
INTER = 256           # config.intermediate_size
BATCH = 2
SEQ = 8

_INV_SQRT2 = 1.0 / math.sqrt(2.0)


def _round_up(x, m):
    return ((x + m - 1) // m) * m


# ----------------------------- kernel -------------------------------------- #
def _intermediate_kernel(x_ref, w_ref, b_ref, out_ref):
    # x_ref: (tm, H) f32, w_ref: (H, I) bf16, b_ref: (1, I) f32,
    # out_ref: (tm, I) out_dtype.
    # In-kernel bf16 cast of the activation is VPU filler under the MXU.
    x_bf = x_ref[...].astype(jnp.bfloat16)
    h = jnp.dot(x_bf, w_ref[...], preferred_element_type=jnp.float32)
    h = h + b_ref[...]                                    # f32 bias add
    # Exact erf GELU (matches torch erf-gelu formula), computed in f32.
    g = h * 0.5 * (1.0 + lax.erf(h * _INV_SQRT2))
    out_ref[...] = g.astype(out_ref.dtype)


# ----------------------------- wrapper -------------------------------------- #
def bert_intermediate(hidden_states, weight, bias, *, tm_max=512,
                      out_dtype=jnp.float32):
    """BertIntermediate.forward (eval): dense(hidden->inter) + erf-GELU.

    hidden_states: (B, L, H) f32
    weight:        (H, I)    f32   (already transposed: y = x @ W + b)
    bias:          (I,)      f32
    returns:       (B, L, I) out_dtype
    """
    B, L, H = hidden_states.shape
    I = weight.shape[1]
    M = B * L

    # Flatten (B, L) into the sublane dimension; keep f32 (cast happens
    # in-kernel).  Pad rows so the row-tile divides evenly.
    x2 = hidden_states.reshape(M, H)
    tm = min(tm_max, _round_up(M, 8))
    m_pad = _round_up(M, tm)
    if m_pad != M:
        x2 = jnp.pad(x2, ((0, m_pad - M), (0, 0)))

    # Weight cast once in the wrapper: it is VMEM-resident across grid steps,
    # so bf16 halves its DMA bytes and footprint.
    w_bf = weight.astype(jnp.bfloat16)
    b2 = bias.reshape(1, I).astype(jnp.float32)

    grid = (m_pad // tm,)

    # VMEM budget: double-buffered x tile + resident bf16 weight + bias +
    # double-buffered output tile, with 2x headroom, clamped to [8, 64] MiB.
    out_bytes = jnp.dtype(out_dtype).itemsize
    vmem_needed = (2 * tm * H * 4) + (2 * H * I * 2) + (2 * I * 4) \
        + (2 * tm * I * out_bytes)
    vmem_limit = int(min(64 * 1024 * 1024,
                         max(8 * 1024 * 1024, 2 * vmem_needed)))

    out = pl.pallas_call(
        _intermediate_kernel,
        out_shape=jax.ShapeDtypeStruct((m_pad, I), out_dtype),
        grid_spec=pltpu.PrefetchScalarGridSpec(
            num_scalar_prefetch=0,
            grid=grid,
            in_specs=[
                pl.BlockSpec((tm, H), lambda i: (i, 0)),   # activation tiles
                pl.BlockSpec((H, I), lambda i: (0, 0)),    # weight, resident
                pl.BlockSpec((1, I), lambda i: (0, 0)),    # bias, resident
            ],
            out_specs=pl.BlockSpec((tm, I), lambda i: (i, 0)),
        ),
        compiler_params=pltpu.CompilerParams(
            dimension_semantics=("parallel",),   # shards M across TCs on v7x
            vmem_limit_bytes=vmem_limit,
        ),
    )(x2, w_bf, b2)

    if m_pad != M:
        out = out[:M]
    return out.reshape(B, L, I)


# ----------------------------- reference ------------------------------------ #
def _reference(hidden_states, weight, bias):
    h = jnp.einsum("blh,hi->bli", hidden_states, weight) + bias
    return h * 0.5 * (1.0 + lax.erf(h * _INV_SQRT2))


# ----------------------------- main ----------------------------------------- #
if __name__ == "__main__":
    root = jax.random.PRNGKey(0)
    kx, kw, kb = jax.random.split(root, 3)

    hidden_states = jax.random.normal(kx, (BATCH, SEQ, HIDDEN), jnp.float32)
    weight = 0.02 * jax.random.normal(kw, (HIDDEN, INTER), jnp.float32)
    bias = 0.01 * jax.random.normal(kb, (INTER,), jnp.float32)

    out = bert_intermediate(hidden_states, weight, bias)
    jax.block_until_ready(out)

    assert out.shape == (BATCH, SEQ, INTER)
    assert bool(jnp.all(jnp.isfinite(out)))

    # Tolerance accounts for bf16 MXU operands with f32 accumulation
    # (elementwise bias/GELU math is f32).
    ref = _reference(hidden_states, weight, bias)
    assert bool(jnp.allclose(out, ref, rtol=5e-2, atol=1e-2)), float(
        jnp.max(jnp.abs(out - ref)))

    print("KERNEL_OK")
</pallas_src>

<mosaic_0001>
module attributes {stable_mosaic.version = 11 : i64} {
  func.func @_intermediate_kernel(%arg0: i32, %arg1: memref<16x128xf32, #tpu.memory_space<vmem>>, %arg2: memref<128x256xbf16, #tpu.memory_space<vmem>>, %arg3: memref<1x256xf32, #tpu.memory_space<vmem>>, %arg4: memref<16x256xf32, #tpu.memory_space<vmem>>) attributes {dimension_semantics = [#tpu.dimension_semantics<parallel>], iteration_bounds = array<i64: 1>, scalar_prefetch = 0 : i64, scratch_operands = 0 : i64, tpu.core_type = #tpu.core_type<tc>, window_params = [{transform_indices = @transform_0, window_bounds = array<i64: 16, 128>}, {pipeline_mode = #tpu.pipeline_mode<synchronous>, transform_indices = @transform_1, window_bounds = array<i64: 128, 256>}, {pipeline_mode = #tpu.pipeline_mode<synchronous>, transform_indices = @transform_2, window_bounds = array<i64: 1, 256>}, {transform_indices = @transform_3, window_bounds = array<i64: 16, 256>}]} {
    %c0 = arith.constant 0 : index
    %c0_0 = arith.constant 0 : index
    %0 = vector.load %arg1[%c0, %c0_0] : memref<16x128xf32, #tpu.memory_space<vmem>>, vector<16x128xf32>
    %1 = arith.truncf %0 : vector<16x128xf32> to vector<16x128xbf16>
    %c0_1 = arith.constant 0 : index
    %c0_2 = arith.constant 0 : index
    %2 = vector.load %arg2[%c0_1, %c0_2] : memref<128x256xbf16, #tpu.memory_space<vmem>>, vector<128x256xbf16>
    %cst = arith.constant dense<0.000000e+00> : vector<16x256xf32>
    %3 = tpu.matmul %1, %2, %cst {dimension_numbers = #tpu.dot_dimension_numbers<[1], [0], [0], [1], [0, 0, 1, 1], [], []>} : vector<16x128xbf16>, vector<128x256xbf16>, vector<16x256xf32> -> vector<16x256xf32>
    %c0_3 = arith.constant 0 : index
    %c0_4 = arith.constant 0 : index
    %4 = vector.load %arg3[%c0_3, %c0_4] : memref<1x256xf32, #tpu.memory_space<vmem>>, vector<1x256xf32>
    %5 = vector.broadcast %4 : vector<1x256xf32> to vector<16x256xf32>
    %6 = arith.addf %3, %5 : vector<16x256xf32>
    %cst_5 = arith.constant 5.000000e-01 : f32
    %7 = vector.broadcast %cst_5 : f32 to vector<16x256xf32>
    %8 = arith.mulf %6, %7 : vector<16x256xf32>
    %cst_6 = arith.constant 0.707106769 : f32
    %9 = vector.broadcast %cst_6 : f32 to vector<16x256xf32>
    %10 = arith.mulf %6, %9 : vector<16x256xf32>
    %11 = math.erf %10 : vector<16x256xf32>
    %cst_7 = arith.constant 1.000000e+00 : f32
    %12 = vector.broadcast %cst_7 : f32 to vector<16x256xf32>
    %13 = arith.addf %12, %11 : vector<16x256xf32>
    %14 = arith.mulf %8, %13 : vector<16x256xf32>
    %c0_8 = arith.constant 0 : index
    %c0_9 = arith.constant 0 : index
    %15 = vector.load %arg4[%c0_8, %c0_9] : memref<16x256xf32, #tpu.memory_space<vmem>>, vector<16x256xf32>
    tpu.vector_store %arg4[%c0_8, %c0_9], %14 {strides = array<i32>} : memref<16x256xf32, #tpu.memory_space<vmem>>, vector<16x256xf32>,
    return
  }
  func.func @transform_0(%arg0: i32) -> (i32, i32) {
    %c0_i32 = arith.constant 0 : i32
    %c0_i32_0 = arith.constant 0 : i32
    return %arg0, %c0_i32 : i32, i32
  }
  func.func @transform_1(%arg0: i32) -> (i32, i32) {
    %c0_i32 = arith.constant 0 : i32
    %c0_i32_0 = arith.constant 0 : i32
    %c0_i32_1 = arith.constant 0 : i32
    return %c0_i32, %c0_i32_0 : i32, i32
  }
  func.func @transform_2(%arg0: i32) -> (i32, i32) {
    %c0_i32 = arith.constant 0 : i32
    %c0_i32_0 = arith.constant 0 : i32
    %c0_i32_1 = arith.constant 0 : i32
    return %c0_i32, %c0_i32_0 : i32, i32
  }
  func.func @transform_3(%arg0: i32) -> (i32, i32) {
    %c0_i32 = arith.constant 0 : i32
    %c0_i32_0 = arith.constant 0 : i32
    return %arg0, %c0_i32 : i32, i32
  }
}

</mosaic_0001>

<llo_original>
// kernel: tpu_custom_call.1
$region0: #{tpu_custom_call.1}
  #allocation0 [shape = 'u32[]', space=smem, size = 0x4, offset = 0x4, fixed_abs, tag = 'smem constant byte address 0x4 - core index']
  #allocation1 [shape = 'u32[144,128]{1,0:T(1,128)}', space=vmem, size = 0x12000, scoped, tag = 'internal scratch']
  %s0 = inlined_call_operand.hbm [shape: f32[16,128], index: 0, kind: input, shape index: {}]
  %s1 = inlined_call_operand.hbm [shape: bf16[128,256], index: 1, kind: input, shape index: {}]
  %s2 = inlined_call_operand.vmem [shape: f32[1,256], index: 2, kind: input, shape index: {}]
  %s3 = inlined_call_operand.hbm [shape: f32[16,256], index: 3, kind: output, shape index: {}]
  %s4 = sld [smem:[#allocation0]]
  $region30: #{tpu_custom_call.1} parent=0
    _
  %s6 = ssub.s32 1, %s4
  %s7 = scalar_select 0, %s6, %s4
  $region1: #{tpu_custom_call.1} parent=0
    #allocation2 [shape = 'u8[8192]{0}', space=vmem, size = 0x2000, scoped, tag = 'input window, operand 0, single buffered']
    #allocation3 [shape = 's32[1]{0}', space=sflag, size = 0x4, scoped, tag = 'scoped memory for tpu_custom_call.1']
    #allocation4 [shape = 's32[1]{0}', space=sflag, size = 0x4, scoped, tag = 'scoped memory for tpu_custom_call.1']
    #allocation5 [shape = 'u8[65536]{0}', space=vmem, size = 0x10000, scoped, tag = 'input window, operand 1, single buffered']
    #allocation6 [shape = 's32[1]{0}', space=sflag, size = 0x4, scoped, tag = 'scoped memory for tpu_custom_call.1']
    #allocation7 [shape = 'u8[16384]{0}', space=vmem, size = 0x4000, scoped, tag = 'output window, operand 0, single buffered']
    %8 = vsyncpa [#allocation3], 0
    %9 = vsyncpa [#allocation6], 0
    %10 = vsyncpa [#allocation4], 0
    // Predicated region
    $region2: #{tpu_custom_call.1} parent=1 // pred_check
      _
    $region3: #{tpu_custom_call.1} parent=1 // pred_check_branch
      %12 = sbr.rel (0) target = $region5
    $region4: #{tpu_custom_call.1} parent=1 // pred_region
      %s14 = ssub.s32 256, 256
      %15 = vsyncadd [#allocation3], %s14
      %s16 = sshll.u32 [#allocation2], 4
      %s17 = int_to_ptr.vmem [resolvable:$true] %s16
      %22 = dma.hbm_to_vmem [thread:$0]  %s0, 256, %s17, [#allocation3], 128, 128, 8
    $region5: #{tpu_custom_call.1} parent=1 // pred_fallthru
      _
    // Predicated region
    $region6: #{tpu_custom_call.1} parent=1 // pred_check
      _
    $region7: #{tpu_custom_call.1} parent=1 // pred_check_branch
      %24 = sbr.rel (0) target = $region9
    $region8: #{tpu_custom_call.1} parent=1 // pred_region
      %s26 = ssub.s32 2048, 2048
      %27 = vsyncadd [#allocation6], %s26
      %s28 = sshll.u32 [#allocation5], 4
      %s29 = int_to_ptr.vmem [resolvable:$true] %s28
      %34 = dma.hbm_to_vmem [thread:$0]  %s1, 2048, %s29, [#allocation6], 128, 128, 8
    $region9: #{tpu_custom_call.1} parent=1 // pred_fallthru
      _
    // Predicated region
    $region10: #{tpu_custom_call.1} parent=1 // pred_check
      _
    $region11: #{tpu_custom_call.1} parent=1 // pred_check_branch
      %36 = sbr.rel (0) target = $region13
    $region12: #{tpu_custom_call.1} parent=1 // pred_region
      _
    $region13: #{tpu_custom_call.1} parent=1 // pred_fallthru
      _
    // Predicated region
    $region14: #{tpu_custom_call.1} parent=1 // pred_check
      _
    $region15: #{tpu_custom_call.1} parent=1 // pred_check_branch
      %38 = sbr.rel (0) target = $region17
    $region16: #{tpu_custom_call.1} parent=1 // pred_region
      %39 = dma.done [#allocation3], 256
    $region17: #{tpu_custom_call.1} parent=1 // pred_fallthru
      _
    // Predicated region
    $region18: #{tpu_custom_call.1} parent=1 // pred_check
      _
    $region19: #{tpu_custom_call.1} parent=1 // pred_check_branch
      %41 = sbr.rel (0) target = $region21
    $region20: #{tpu_custom_call.1} parent=1 // pred_region
      %42 = dma.done [#allocation6], 2048
    $region21: #{tpu_custom_call.1} parent=1 // pred_fallthru
      _
    %v44 = vld [vmem:[#allocation2] sm:$0xff]
    %v45 = vld [vmem:[#allocation2 + $0x8] sm:$0xff]
    %v46 = vpack.c.bf16 %v45, %v44
    %v47 = vld [vmem:[#allocation5] sm:$0xff]
    %v48 = vld [vmem:[#allocation5 + $0x8] sm:$0xff]
    %v49 = vld [vmem:[#allocation5 + $0x10] sm:$0xff]
    %v50 = vld [vmem:[#allocation5 + $0x18] sm:$0xff]
    %v51 = vld [vmem:[#allocation5 + $0x20] sm:$0xff]
    %v52 = vld [vmem:[#allocation5 + $0x28] sm:$0xff]
    %v53 = vld [vmem:[#allocation5 + $0x30] sm:$0xff]
    %v54 = vld [vmem:[#allocation5 + $0x38] sm:$0xff]
    %v55 = vld [vmem:[#allocation5 + $0x40] sm:$0xff]
    %v56 = vld [vmem:[#allocation5 + $0x48] sm:$0xff]
    %v57 = vld [vmem:[#allocation5 + $0x50] sm:$0xff]
    %v58 = vld [vmem:[#allocation5 + $0x58] sm:$0xff]
    %v59 = vld [vmem:[#allocation5 + $0x60] sm:$0xff]
    %v60 = vld [vmem:[#allocation5 + $0x68] sm:$0xff]
    %v61 = vld [vmem:[#allocation5 + $0x70] sm:$0xff]
    %v62 = vld [vmem:[#allocation5 + $0x78] sm:$0xff]
    %v63 = vld [vmem:[%s2] sm:$0x3]
    %v65 = vlaneseq
    %v66 = vshrl.u32 %v65, 7
    %v67 = vsub.s32 0, %v66
    %v68 = vrot.slane %v63, %v67
    %v69 = vlaneseq
    %v70 = vshrl.u32 %v69, 7
    %v71 = vsub.s32 1, %v70
    %v72 = vrot.slane %v63, %v71
    %v91 = vunpack.c.l.b16 %v47
    %v92 = vunpack.c.h.b16 %v47
    %v93 = vunpack.c.l.b16 %v48
    %v94 = vunpack.c.h.b16 %v48
    %v95 = vunpack.c.l.b16 %v49
    %v96 = vunpack.c.h.b16 %v49
    %v97 = vunpack.c.l.b16 %v50
    %v98 = vunpack.c.h.b16 %v50
    %v99 = vunpack.c.l.b16 %v51
    %v100 = vunpack.c.h.b16 %v51
    %v101 = vunpack.c.l.b16 %v52
    %v102 = vunpack.c.h.b16 %v52
    %v103 = vunpack.c.l.b16 %v53
    %v104 = vunpack.c.h.b16 %v53
    %v105 = vunpack.c.l.b16 %v54
    %v106 = vunpack.c.h.b16 %v54
    %v107 = vunpack.c.l.b16 %v55
    %v108 = vunpack.c.h.b16 %v55
    %v109 = vunpack.c.l.b16 %v56
    %v110 = vunpack.c.h.b16 %v56
    %v111 = vunpack.c.l.b16 %v57
    %v112 = vunpack.c.h.b16 %v57
    %v113 = vunpack.c.l.b16 %v58
    %v114 = vunpack.c.h.b16 %v58
    %v115 = vunpack.c.l.b16 %v59
    %v116 = vunpack.c.h.b16 %v59
    %v117 = vunpack.c.l.b16 %v60
    %v118 = vunpack.c.h.b16 %v60
    %v119 = vunpack.c.l.b16 %v61
    %v120 = vunpack.c.h.b16 %v61
    %v121 = vunpack.c.l.b16 %v62
    %v122 = vunpack.c.h.b16 %v62
    %v123 = vpack.c.b16 %v93, %v91
    %v124 = vpack.c.b16 %v94, %v92
    %v125 = vpack.c.b16 %v97, %v95
    %v126 = vpack.c.b16 %v98, %v96
    %v127 = vpack.c.b16 %v101, %v99
    %v128 = vpack.c.b16 %v102, %v100
    %v129 = vpack.c.b16 %v105, %v103
    %v130 = vpack.c.b16 %v106, %v104
    %v131 = vpack.c.b16 %v109, %v107
    %v132 = vpack.c.b16 %v110, %v108
    %v133 = vpack.c.b16 %v113, %v111
    %v134 = vpack.c.b16 %v114, %v112
    %v135 = vpack.c.b16 %v117, %v115
    %v136 = vpack.c.b16 %v118, %v116
    %v137 = vpack.c.b16 %v121, %v119
    %v138 = vpack.c.b16 %v122, %v120
    %155 = vmatprep.subr.bf16.mxu0 %v124
    %156 = vmatpush1.bf16.msra.mxu0 %v123
    %157 = vmatprep.subr.bf16.mxu0 %v126
    %158 = vmatpush1.bf16.msra.mxu0 %v125
    %159 = vmatprep.subr.bf16.mxu0 %v128
    %160 = vmatpush1.bf16.msra.mxu0 %v127
    %161 = vmatprep.subr.bf16.mxu0 %v130
    %162 = vmatpush1.bf16.msra.mxu0 %v129
    %163 = vmatprep.subr.bf16.mxu0 %v132
    %164 = vmatpush1.bf16.msra.mxu0 %v131
    %165 = vmatprep.subr.bf16.mxu0 %v134
    %166 = vmatpush1.bf16.msra.mxu0 %v133
    %167 = vmatprep.subr.bf16.mxu0 %v136
    %168 = vmatpush1.bf16.msra.mxu0 %v135
    %169 = vmatprep.subr.bf16.mxu0 %v138
    %170 = vmatpush1.bf16.msra.mxu0 %v137
    %171 = vmatprep.subr.bf16.mxu0 0
    %172 = vmatpush1.bf16.msra.mxu0 0
    %173 = vmatprep.subr.bf16.mxu0 0
    %174 = vmatpush1.bf16.msra.mxu0 0
    %175 = vmatprep.subr.bf16.mxu0 0
    %176 = vmatpush1.bf16.msra.mxu0 0
    %177 = vmatprep.subr.bf16.mxu0 0
    %178 = vmatpush1.bf16.msra.mxu0 0
    %179 = vmatprep.subr.bf16.mxu0 0
    %180 = vmatpush1.bf16.msra.mxu0 0
    %181 = vmatprep.subr.bf16.mxu0 0
    %182 = vmatpush1.bf16.msra.mxu0 0
    %183 = vmatprep.subr.bf16.mxu0 0
    %184 = vmatpush1.bf16.msra.mxu0 0
    %185 = vmatprep.subr.bf16.mxu0 0
    %186 = vmatpush1.bf16.msra.mxu0 0
    %187 = vmatprep.mubr.bf16.mxu0 0
    %188 = vmatmul.mubr.bf16.gmra.mrb[0].mxu0 %v46
    %v189 = vpop.f32.mrb[0].mxu0
    %v190 = vadd.f32 %v68, %v189
    %v191 = vpop.f32.mrb[0].mxu0
    %v192 = vadd.f32 %v72, %v191
    %v193 = vpop.f32.mrb[0].mxu0
    %v194 = vadd.f32 %v68, %v193
    %v195 = vpop.f32.mrb[0].mxu0
    %v196 = vadd.f32 %v72, %v195
    %197 = vdwg.mxu0
    %v198 = vmul.f32 %v190, 0.5
    %v199 = vmul.f32 %v192, 0.5
    %v200 = vmul.f32 %v194, 0.5
    %v201 = vmul.f32 %v196, 0.5
    %v202 = vmul.f32 %v190, 0.70710677
    %v203 = vmul.f32 %v192, 0.70710677
    %v204 = vmul.f32 %v194, 0.70710677
    %v205 = vmul.f32 %v196, 0.70710677
    %v206 = verf.f32.pop %v202
    %v207 = verf.f32.pop %v203
    %v208 = verf.f32.pop %v204
    %v209 = verf.f32.pop %v205
    %v210 = vadd.f32 %v206, 1.0
    %v211 = vadd.f32 %v207, 1.0
    %v212 = vadd.f32 %v208, 1.0
    %v213 = vadd.f32 %v209, 1.0
    %v214 = vmul.f32 %v198, %v210
    %v215 = vmul.f32 %v199, %v211
    %v216 = vmul.f32 %v200, %v212
    %v217 = vmul.f32 %v201, %v213
    %218 = vst [vmem:[#allocation7] sm:$0xff] %v214
    %219 = vst [vmem:[#allocation7 + $0x8] sm:$0xff] %v215
    %220 = vst [vmem:[#allocation7 + $0x10] sm:$0xff] %v216
    %221 = vst [vmem:[#allocation7 + $0x18] sm:$0xff] %v217
    // Predicated region
    $region22: #{tpu_custom_call.1} parent=1 // pred_check
      _
    $region23: #{tpu_custom_call.1} parent=1 // pred_check_branch
      %223 = sbr.rel (0) target = $region25
    $region24: #{tpu_custom_call.1} parent=1 // pred_region
      %s225 = ssub.s32 512, 512
      %226 = vsyncadd [#allocation4], %s225
      %s227 = sshll.u32 [#allocation7], 4
      %s228 = int_to_ptr.vmem [resolvable:$true] %s227
      %233 = dma.vmem_to_hbm [thread:$0]  %s228, 512, %s3, [#allocation4], 256, 256, 16
    $region25: #{tpu_custom_call.1} parent=1 // pred_fallthru
      _
    // Predicated region
    $region26: #{tpu_custom_call.1} parent=1 // pred_check
      _
    $region27: #{tpu_custom_call.1} parent=1 // pred_check_branch
      %235 = sbr.rel (0) target = $region29
    $region28: #{tpu_custom_call.1} parent=1 // pred_region
      %236 = dma.done [#allocation4], 512
    $region29: #{tpu_custom_call.1} parent=1 // pred_fallthru
      _
    %237 = vsyncpa [#allocation3], 1
    %238 = vsyncpa [#allocation6], 1
    %239 = vsyncpa [#allocation4], 1

</llo_original>
